<compile_context>
chip_gen: v7x
topology: tpu7x:2x2x1
jax: 0.10.0
libtpu: 0.0.40
codegen_flags: <defaults>
</compile_context>

<pallas_src>
import functools

import jax
import jax.numpy as jnp
from jax.experimental import pallas as pl
from jax.experimental.pallas import tpu as pltpu


# ---------------------------------------------------------------------------
# Kernels
# ---------------------------------------------------------------------------
def fused_kernel(x_ref, w1_ref, w2_ref, o_ref, *, inv_hw):
    """One batch per grid step.  x_ref/o_ref: (C, HW); w1: (Cr, C); w2: (C, Cr)."""
    x = x_ref[...]                                                    # (C, HW)
    # Global average pool: f32 accumulation over the lane (spatial) axis.
    pooled = jnp.sum(x.astype(jnp.float32), axis=1, keepdims=True) * inv_hw  # (C, 1)
    # Gate MLP as two column mat-vecs (MXU); operands are not pre-cast.
    h = jnp.dot(w1_ref[...], pooled, preferred_element_type=jnp.float32)     # (Cr, 1)
    h = jnp.maximum(h, 0.0)                                                  # ReLU
    g = jnp.dot(w2_ref[...], h, preferred_element_type=jnp.float32)          # (C, 1)
    g = jax.nn.sigmoid(g)
    # Rescale in x's native dtype (bf16-native multiply on v6e/v7x).
    o_ref[...] = (x * g.astype(x.dtype)).astype(o_ref.dtype)


def pool_gate_kernel(x_ref, w1_ref, w2_ref, gate_ref, *, hw, tile, inv_hw):
    """Fallback pass 1: accumulate spatial sums in the resident (C, 1) output
    block across HW tiles and fold the gate MLP into the last tile."""
    t = pl.program_id(1)

    @pl.when(t == 0)
    def _init():
        gate_ref[...] = jnp.zeros_like(gate_ref)

    x = x_ref[...].astype(jnp.float32)                                # (C, T)
    if hw % tile != 0:
        # Ragged spatial tail: mask out-of-bounds lanes before reducing.
        lane = jax.lax.broadcasted_iota(jnp.int32, x.shape, 1)
        x = jnp.where(t * tile + lane < hw, x, 0.0)
    gate_ref[...] += jnp.sum(x, axis=1, keepdims=True)

    @pl.when(t == pl.num_programs(1) - 1)
    def _finalize():
        pooled = gate_ref[...] * inv_hw                               # (C, 1)
        h = jnp.maximum(
            jnp.dot(w1_ref[...], pooled, preferred_element_type=jnp.float32), 0.0)
        g = jnp.dot(w2_ref[...], h, preferred_element_type=jnp.float32)
        gate_ref[...] = jax.nn.sigmoid(g)


def scale_kernel(gate_ref, x_ref, o_ref):
    """Fallback pass 2: per-channel rescale.  gate: (C, 1) f32; x/o: (C, T).
    Out-of-bounds lanes of the last tile are dropped by Pallas on store."""
    x = x_ref[...]
    o_ref[...] = (x * gate_ref[...].astype(x.dtype)).astype(o_ref.dtype)


# ---------------------------------------------------------------------------
# Wrapper
# ---------------------------------------------------------------------------
def _vmem_capacity_bytes():
    try:
        return int(pltpu.get_tpu_info().vmem_capacity_bytes)
    except Exception:
        return 64 * 1024 * 1024            # conservative: v7x per-TC VMEM


def _round_down_128(n):
    return max(128, (n // 128) * 128)


def attention_layer(x_nchw, w1, w2, *, vmem_budget_bytes=None):
    """x_nchw: (B, C, H, W); w1: (Cr, C), w2: (C, Cr) (PyTorch Linear layout)."""
    B, C, H, W = x_nchw.shape
    Cr = w1.shape[0]
    HW = H * W
    dtype = x_nchw.dtype
    itemsize = jnp.dtype(dtype).itemsize

    # NCHW -> (B, C, HW): free trailing-dim reshape (channels on sublanes,
    # flattened spatial on lanes); no transpose, no padding.
    x = x_nchw.reshape(B, C, HW)

    cap = _vmem_capacity_bytes()
    # Generation-aware compute-block budget: ~19 MiB on v7x (64 MiB VMEM/TC),
    # ~38 MiB on v5e/v6e (128 MiB).
    budget = (vmem_budget_bytes if vmem_budget_bytes is not None
              else min(48 << 20, (cap * 3) // 10))
    limit_cap = (cap * 4) // 5
    w_bytes = (w1.size * jnp.dtype(w1.dtype).itemsize
               + w2.size * jnp.dtype(w2.dtype).itemsize)
    inv_hw = 1.0 / HW

    # ----------------- Fused single-pass path (1 read + 1 write of x) -------
    # Double-buffered in+out blocks plus one f32 temporary for the pooling.
    fused_need = 4 * C * HW * itemsize + 4 * C * HW + 2 * w_bytes + (1 << 20)
    if fused_need <= budget:
        vmem_limit = min(limit_cap, max(32 << 20, fused_need + (8 << 20)))
        out = pl.pallas_call(
            functools.partial(fused_kernel, inv_hw=inv_hw),
            out_shape=jax.ShapeDtypeStruct((B, C, HW), dtype),
            grid_spec=pltpu.PrefetchScalarGridSpec(
                num_scalar_prefetch=0,
                grid=(B,),
                in_specs=[pl.BlockSpec((None, C, HW), lambda b: (b, 0, 0)),
                          pl.BlockSpec((Cr, C), lambda b: (0, 0)),
                          pl.BlockSpec((C, Cr), lambda b: (0, 0))],
                out_specs=pl.BlockSpec((None, C, HW), lambda b: (b, 0, 0)),
            ),
            compiler_params=pltpu.CompilerParams(
                dimension_semantics=("parallel",),
                vmem_limit_bytes=vmem_limit),
        )(x, w1, w2)
        return out.reshape(B, C, H, W)

    # ----------------- Fallback: two tiled passes (x slab too big) ----------
    # Lane-dense tiles, cdiv grids + in-kernel tail handling (no pad/slice).
    t_cap = max(128, (HW // 128) * 128)
    # Pass 1 carries only the double-buffered input block (+ f32/mask temps).
    t1 = min(2048, t_cap, _round_down_128(budget // max(1, C * (2 * itemsize + 8))))
    # Pass 2 carries double-buffered input AND output blocks.
    t2 = min(2048, t_cap, _round_down_128(budget // max(1, C * (5 * itemsize + 4))))
    num_t1 = pl.cdiv(HW, t1)
    num_t2 = pl.cdiv(HW, t2)

    need1 = C * t1 * (2 * itemsize + 8) + 2 * w_bytes + (1 << 20)
    need2 = C * t2 * (5 * itemsize + 4) + (1 << 20)
    limit1 = min(limit_cap, max(32 << 20, need1 + (8 << 20)))
    limit2 = min(limit_cap, max(32 << 20, need2 + (8 << 20)))

    # Pass 1: spatial sums accumulated in the resident output block, gate MLP
    # folded into the last HW tile -> gates (B, C, 1) in f32.
    gates = pl.pallas_call(
        functools.partial(pool_gate_kernel, hw=HW, tile=t1, inv_hw=inv_hw),
        out_shape=jax.ShapeDtypeStruct((B, C, 1), jnp.float32),
        grid_spec=pltpu.PrefetchScalarGridSpec(
            num_scalar_prefetch=0,
            grid=(B, num_t1),
            in_specs=[pl.BlockSpec((None, C, t1), lambda b, t: (b, 0, t)),
                      pl.BlockSpec((Cr, C), lambda b, t: (0, 0)),
                      pl.BlockSpec((C, Cr), lambda b, t: (0, 0))],
            out_specs=pl.BlockSpec((None, C, 1), lambda b, t: (b, 0, 0)),
        ),
        compiler_params=pltpu.CompilerParams(
            dimension_semantics=("parallel", "arbitrary"),
            vmem_limit_bytes=limit1),
    )(x, w1, w2)

    # Pass 2: per-channel rescale; both axes parallel (v7x 2-TC sharding even
    # when B is small).
    out = pl.pallas_call(
        scale_kernel,
        out_shape=jax.ShapeDtypeStruct((B, C, HW), dtype),
        grid_spec=pltpu.PrefetchScalarGridSpec(
            num_scalar_prefetch=0,
            grid=(B, num_t2),
            in_specs=[pl.BlockSpec((None, C, 1), lambda b, t: (b, 0, 0)),
                      pl.BlockSpec((None, C, t2), lambda b, t: (b, 0, t))],
            out_specs=pl.BlockSpec((None, C, t2), lambda b, t: (b, 0, t)),
        ),
        compiler_params=pltpu.CompilerParams(
            dimension_semantics=("parallel", "parallel"),
            vmem_limit_bytes=limit2),
    )(gates, x)

    return out.reshape(B, C, H, W)


def attention_layer_ref(x_nchw, w1, w2):
    """Pure-JAX reference matching the PyTorch module."""
    y = jnp.mean(x_nchw.astype(jnp.float32), axis=(2, 3))            # (B, C)
    y = jnp.maximum(y @ w1.astype(jnp.float32).T, 0.0)               # (B, Cr)
    y = jax.nn.sigmoid(y @ w2.astype(jnp.float32).T)                 # (B, C)
    return (x_nchw.astype(jnp.float32) * y[:, :, None, None]).astype(x_nchw.dtype)


if __name__ == "__main__":
    B, C, reduction = 2, 32, 16
    Cr = C // reduction

    key = jax.random.PRNGKey(0)
    kx, k1, k2, kx2 = jax.random.split(key, 4)
    # Deterministic synthetic Linear weights (PyTorch convention: (out, in)).
    w1 = jax.random.normal(k1, (Cr, C), dtype=jnp.float32) * (1.0 / jnp.sqrt(C))
    w2 = jax.random.normal(k2, (C, Cr), dtype=jnp.float32) * (1.0 / jnp.sqrt(Cr))

    # 1) Fused single-pass path (the common case).
    x = jax.random.normal(kx, (B, C, 16, 16), dtype=jnp.float32)
    fused_fn = jax.jit(attention_layer)
    out = jax.block_until_ready(fused_fn(x, w1, w2))
    ref = attention_layer_ref(x, w1, w2)
    assert out.shape == x.shape
    assert jnp.allclose(out, ref, atol=1e-5, rtol=1e-5), "fused path mismatch"

    # 2) Tiled fallback path with a ragged spatial tail (24*24 = 576 is not a
    #    multiple of 128); a tiny budget override forces the two-pass path and
    #    multi-tile accumulation with in-kernel tail masking.
    x2 = jax.random.normal(kx2, (B, C, 24, 24), dtype=jnp.float32)
    fallback_fn = jax.jit(functools.partial(attention_layer,
                                            vmem_budget_bytes=64 * 1024))
    out2 = jax.block_until_ready(fallback_fn(x2, w1, w2))
    ref2 = attention_layer_ref(x2, w1, w2)
    assert out2.shape == x2.shape
    assert jnp.allclose(out2, ref2, atol=1e-5, rtol=1e-5), "fallback path mismatch"

    print("KERNEL_OK")
</pallas_src>

<mosaic_0001>
module attributes {stable_mosaic.version = 11 : i64} {
  func.func @fused_kernel(%arg0: i32, %arg1: memref<1x32x256xf32, #tpu.memory_space<vmem>>, %arg2: memref<2x32xf32, #tpu.memory_space<vmem>>, %arg3: memref<32x2xf32, #tpu.memory_space<vmem>>, %arg4: memref<1x32x256xf32, #tpu.memory_space<vmem>>) attributes {dimension_semantics = [#tpu.dimension_semantics<parallel>], iteration_bounds = array<i64: 2>, scalar_prefetch = 0 : i64, scratch_operands = 0 : i64, tpu.core_type = #tpu.core_type<tc>, window_params = [{transform_indices = @transform_0, window_bounds = array<i64: 1, 32, 256>}, {pipeline_mode = #tpu.pipeline_mode<synchronous>, transform_indices = @transform_1, window_bounds = array<i64: 2, 32>}, {pipeline_mode = #tpu.pipeline_mode<synchronous>, transform_indices = @transform_2, window_bounds = array<i64: 32, 2>}, {transform_indices = @transform_3, window_bounds = array<i64: 1, 32, 256>}]} {
    %c0 = arith.constant 0 : index
    %c0_0 = arith.constant 0 : index
    %c0_1 = arith.constant 0 : index
    %0 = vector.load %arg1[%c0, %c0_0, %c0_1] : memref<1x32x256xf32, #tpu.memory_space<vmem>>, vector<1x32x256xf32>
    %1 = vector.shape_cast %0 : vector<1x32x256xf32> to vector<32x256xf32>
    %cst = arith.constant dense<0.000000e+00> : vector<32xf32>
    %2 = vector.multi_reduction <add>, %1, %cst [1] : vector<32x256xf32> to vector<32xf32>
    %3 = vector.shape_cast %2 : vector<32xf32> to vector<32x1xf32>
    %cst_2 = arith.constant 3.906250e-03 : f32
    %4 = vector.broadcast %cst_2 : f32 to vector<32x1xf32>
    %5 = arith.mulf %3, %4 : vector<32x1xf32>
    %c0_3 = arith.constant 0 : index
    %c0_4 = arith.constant 0 : index
    %6 = vector.load %arg2[%c0_3, %c0_4] : memref<2x32xf32, #tpu.memory_space<vmem>>, vector<2x32xf32>
    %cst_5 = arith.constant dense<0.000000e+00> : vector<2x1xf32>
    %7 = tpu.matmul %6, %5, %cst_5 {dimension_numbers = #tpu.dot_dimension_numbers<[1], [0], [0], [1], [0, 0, 1, 1], [], []>} : vector<2x32xf32>, vector<32x1xf32>, vector<2x1xf32> -> vector<2x1xf32>
    %cst_6 = arith.constant 0.000000e+00 : f32
    %8 = vector.broadcast %cst_6 : f32 to vector<2x1xf32>
    %9 = arith.maximumf %7, %8 : vector<2x1xf32>
    %c0_7 = arith.constant 0 : index
    %c0_8 = arith.constant 0 : index
    %10 = vector.load %arg3[%c0_7, %c0_8] : memref<32x2xf32, #tpu.memory_space<vmem>>, vector<32x2xf32>
    %cst_9 = arith.constant dense<0.000000e+00> : vector<32x1xf32>
    %11 = tpu.matmul %10, %9, %cst_9 {dimension_numbers = #tpu.dot_dimension_numbers<[1], [0], [0], [1], [0, 0, 1, 1], [], []>} : vector<32x2xf32>, vector<2x1xf32>, vector<32x1xf32> -> vector<32x1xf32>
    %12 = arith.negf %11 : vector<32x1xf32>
    %13 = math.exp %12 : vector<32x1xf32>
    %cst_10 = arith.constant 1.000000e+00 : f32
    %14 = vector.broadcast %cst_10 : f32 to vector<32x1xf32>
    %15 = arith.addf %14, %13 : vector<32x1xf32>
    %16 = arith.divf %14, %15 : vector<32x1xf32>
    %17 = vector.broadcast %16 : vector<32x1xf32> to vector<32x256xf32>
    %18 = arith.mulf %1, %17 : vector<32x256xf32>
    %c0_11 = arith.constant 0 : index
    %c0_12 = arith.constant 0 : index
    %c0_13 = arith.constant 0 : index
    %19 = vector.load %arg4[%c0_11, %c0_12, %c0_13] : memref<1x32x256xf32, #tpu.memory_space<vmem>>, vector<1x32x256xf32>
    %20 = vector.shape_cast %19 : vector<1x32x256xf32> to vector<32x256xf32>
    %21 = vector.shape_cast %18 : vector<32x256xf32> to vector<1x32x256xf32>
    tpu.vector_store %arg4[%c0_11, %c0_12, %c0_13], %21 {strides = array<i32>} : memref<1x32x256xf32, #tpu.memory_space<vmem>>, vector<1x32x256xf32>,
    return
  }
  func.func @transform_0(%arg0: i32) -> (i32, i32, i32) {
    %c0_i32 = arith.constant 0 : i32
    %c0_i32_0 = arith.constant 0 : i32
    %c0_i32_1 = arith.constant 0 : i32
    return %arg0, %c0_i32, %c0_i32_0 : i32, i32, i32
  }
  func.func @transform_1(%arg0: i32) -> (i32, i32) {
    %c0_i32 = arith.constant 0 : i32
    %c0_i32_0 = arith.constant 0 : i32
    %c0_i32_1 = arith.constant 0 : i32
    return %c0_i32, %c0_i32_0 : i32, i32
  }
  func.func @transform_2(%arg0: i32) -> (i32, i32) {
    %c0_i32 = arith.constant 0 : i32
    %c0_i32_0 = arith.constant 0 : i32
    %c0_i32_1 = arith.constant 0 : i32
    return %c0_i32, %c0_i32_0 : i32, i32
  }
  func.func @transform_3(%arg0: i32) -> (i32, i32, i32) {
    %c0_i32 = arith.constant 0 : i32
    %c0_i32_0 = arith.constant 0 : i32
    %c0_i32_1 = arith.constant 0 : i32
    return %arg0, %c0_i32, %c0_i32_0 : i32, i32, i32
  }
}

</mosaic_0001>

<llo_original>
// kernel: attention_layer.1
$region0: #{attention_layer.1}
  #allocation0 [shape = 'u32[]', space=smem, size = 0x4, offset = 0x4, fixed_abs, tag = 'smem constant byte address 0x4 - core index']
  #allocation1 [shape = 'u32[144,128]{1,0:T(1,128)}', space=vmem, size = 0x12000, scoped, tag = 'internal scratch']
  %s0 = inlined_call_operand.vmem [shape: f32[2,32,256], index: 0, kind: input, shape index: {}]
  %s1 = inlined_call_operand.vmem [shape: f32[2,32], index: 1, kind: input, shape index: {}]
  %s2 = inlined_call_operand.vmem [shape: f32[32,2], index: 2, kind: input, shape index: {}]
  %s3 = inlined_call_operand.vmem [shape: f32[2,32,256], index: 3, kind: output, shape index: {}]
  %s4 = sld [smem:[#allocation0]]
  $region45: #{attention_layer.1} parent=0
    _
  %s6 = ssub.s32 1, %s4
  %s7 = scalar_select 0, %s6, %s4
  loop: start=0, step=1, limit=4
  $region2: #{attention_layer.1} parent=0 // loop_pre_header
    _
  $region3: #{attention_layer.1} parent=0 // loop_header
    %s9 = sphi 0, %s13
    %p10 = scmp.ge.s32.totalorder %s9, 4
    %s19 = sphi 0, %s21
    %s22 = sphi 0, %s19
    %s23 = sphi 0, %s22
    %s39 = sphi 0, %s23
    %s43 = sphi 0, %s43
    %s45 = sphi 0, %s43
    %s46 = sphi 0, %s45
    %s60 = sphi 0, %s46
    %s64 = sphi 0, %s64
    %s66 = sphi 0, %s64
    %s67 = sphi 0, %s66
    %s81 = sphi 0, %s67
    %s87 = sphi 0, %s89
    %s90 = sphi 0, %s87
    %s91 = sphi 0, %s90
    %s107 = sphi 0, %s91
  $region4: #{attention_layer.1} parent=0 // loop_header_branch
    %12 = sbr.rel (%p10) target = $region8
  $region5: #{attention_layer.1} parent=0 // loop_body
    %s14 = ssub.s32 %s9, 1
    %s15 = ssub.s32 %s9, 2
    %s16 = sadd.s32 %s9, 1
    %s17 = ssub.s32 %s9, %s16
    %p18 = scmp.eq.s32.totalorder %s17, 0
    %s20 = sadd.s32 %s19, 1
    %s21 = scalar_select %p18, %s19, %s20
    %p24 = pneg %p18
    %p25 = scmp.eq.s32.totalorder %s9, 1
    %p26 = por %p24, %p25
    %p27 = scmp.ne.s32.totalorder %s19, %s22
    %p28 = scmp.eq.s32.totalorder %s9, 0
    %p29 = por %p27, %p28
    %p30 = scmp.ne.s32.totalorder %s19, %s22
    %p31 = scmp.eq.s32.totalorder %s14, 1
    %p32 = por %p30, %p31
    %p33 = scmp.ne.s32.totalorder %s22, %s23
    %p34 = scmp.eq.s32.totalorder %s14, 0
    %p35 = por %p33, %p34
    %p36 = scmp.ne.s32.totalorder %s22, %s23
    %p37 = scmp.eq.s32.totalorder %s15, 1
    %p38 = por %p36, %p37
    %p40 = scmp.ne.s32.totalorder %s23, %s39
    %p41 = scmp.eq.s32.totalorder %s15, 0
    %p42 = por %p40, %p41
    %s44 = sadd.s32 %s43, 1
    %p47 = scmp.eq.s32.totalorder %s9, 1
    %p48 = scmp.ne.s32.totalorder %s43, %s45
    %p49 = scmp.eq.s32.totalorder %s9, 0
    %p50 = por %p48, %p49
    %p51 = scmp.ne.s32.totalorder %s43, %s45
    %p52 = scmp.eq.s32.totalorder %s14, 1
    %p53 = por %p51, %p52
    %p54 = scmp.ne.s32.totalorder %s45, %s46
    %p55 = scmp.eq.s32.totalorder %s14, 0
    %p56 = por %p54, %p55
    %p57 = scmp.ne.s32.totalorder %s45, %s46
    %p58 = scmp.eq.s32.totalorder %s15, 1
    %p59 = por %p57, %p58
    %p61 = scmp.ne.s32.totalorder %s46, %s60
    %p62 = scmp.eq.s32.totalorder %s15, 0
    %p63 = por %p61, %p62
    %s65 = sadd.s32 %s64, 1
    %p68 = scmp.eq.s32.totalorder %s9, 1
    %p69 = scmp.ne.s32.totalorder %s64, %s66
    %p70 = scmp.eq.s32.totalorder %s9, 0
    %p71 = por %p69, %p70
    %p72 = scmp.ne.s32.totalorder %s64, %s66
    %p73 = scmp.eq.s32.totalorder %s14, 1
    %p74 = por %p72, %p73
    %p75 = scmp.ne.s32.totalorder %s66, %s67
    %p76 = scmp.eq.s32.totalorder %s14, 0
    %p77 = por %p75, %p76
    %p78 = scmp.ne.s32.totalorder %s66, %s67
    %p79 = scmp.eq.s32.totalorder %s15, 1
    %p80 = por %p78, %p79
    %p82 = scmp.ne.s32.totalorder %s67, %s81
    %p83 = scmp.eq.s32.totalorder %s15, 0
    %p84 = por %p82, %p83
    %s85 = ssub.s32 %s9, %s16
    %p86 = scmp.eq.s32.totalorder %s85, 0
    %s88 = sadd.s32 %s87, 1
    %s89 = scalar_select %p86, %s87, %s88
    %p92 = pneg %p86
    %p93 = scmp.eq.s32.totalorder %s9, 1
    %p94 = por %p92, %p93
    %p95 = scmp.ne.s32.totalorder %s87, %s90
    %p96 = scmp.eq.s32.totalorder %s9, 0
    %p97 = por %p95, %p96
    %p98 = scmp.ne.s32.totalorder %s87, %s90
    %p99 = scmp.eq.s32.totalorder %s14, 1
    %p100 = por %p98, %p99
    %p101 = scmp.ne.s32.totalorder %s90, %s91
    %p102 = scmp.eq.s32.totalorder %s14, 0
    %p103 = por %p101, %p102
    %p104 = scmp.ne.s32.totalorder %s90, %s91
    %p105 = scmp.eq.s32.totalorder %s15, 1
    %p106 = por %p104, %p105
    %p108 = scmp.ne.s32.totalorder %s91, %s107
    %p109 = scmp.eq.s32.totalorder %s15, 0
    %p110 = por %p108, %p109
    %p111 = scmp.le.s32.totalorder 1, %s9
    %p112 = scmp.lt.s32.totalorder %s9, 3
    %p113 = pnand %p111, %p112
    %p114 = pneg %p113
    // Predicated region
    $region9: #{attention_layer.1} parent=5 // pred_check
      _
    $region10: #{attention_layer.1} parent=5 // pred_check_branch
      %116 = sbr.rel (%p113) target = $region12
    $region11: #{attention_layer.1} parent=5 // pred_region
      %s117 = ssub.s32 %s9, 1
      // Predicated region
      $region13: #{attention_layer.1} parent=11 // pred_check
        %p118 = pneg %p56
      $region14: #{attention_layer.1} parent=11 // pred_check_branch
        %120 = sbr.rel (%p118) target = $region16
      $region15: #{attention_layer.1} parent=11 // pred_region
        _
      $region16: #{attention_layer.1} parent=11 // pred_fallthru
        _
      // Predicated region
      $region17: #{attention_layer.1} parent=11 // pred_check
        %p121 = pneg %p77
      $region18: #{attention_layer.1} parent=11 // pred_check_branch
        %123 = sbr.rel (%p121) target = $region20
      $region19: #{attention_layer.1} parent=11 // pred_region
        _
      $region20: #{attention_layer.1} parent=11 // pred_fallthru
        _
    $region12: #{attention_layer.1} parent=5 // pred_fallthru
      _
    %p124 = scmp.lt.s32.totalorder %s9, 2
    // Predicated region
    $region21: #{attention_layer.1} parent=5 // pred_check
      %p125 = pneg %p124
    $region22: #{attention_layer.1} parent=5 // pred_check_branch
      %127 = sbr.rel (%p125) target = $region24
    $region23: #{attention_layer.1} parent=5 // pred_region
      // Predicated region
      $region25: #{attention_layer.1} parent=23 // pred_check
        %p128 = pneg %p29
      $region26: #{attention_layer.1} parent=23 // pred_check_branch
        %130 = sbr.rel (%p128) target = $region28
      $region27: #{attention_layer.1} parent=23 // pred_region
        %p131 = scmp.lt.s32.totalorder %s9, 1
        %s132 = scalar_select %p131, %s9, 1
        %s133 = smul.addr %s132, 8
        %s134 = smul.addr %s133, 8
        %s135 = scalar_lea.vmem %s0, %s134
      $region28: #{attention_layer.1} parent=23 // pred_fallthru
        _
    $region24: #{attention_layer.1} parent=5 // pred_fallthru
      _
    %p136 = scmp.le.s32.totalorder 1, %s9
    %p137 = scmp.lt.s32.totalorder %s9, 3
    %p138 = pnand %p136, %p137
    %p139 = pneg %p138
    // Predicated region
    $region29: #{attention_layer.1} parent=5 // pred_check
      _
    $region30: #{attention_layer.1} parent=5 // pred_check_branch
      %141 = sbr.rel (%p138) target = $region32
    $region31: #{attention_layer.1} parent=5 // pred_region
      %s142 = ssub.s32 %s9, 1
      %p143 = scmp.lt.s32.totalorder %s14, 1
      %s144 = scalar_select %p143, %s14, 1
      %s145 = smul.addr %s144, 8
      %s146 = smul.addr %s145, 8
      %s147 = scalar_lea.vmem %s0, %s146
      %p148 = pneg %p35
      %p149 = pneg %p32
      %p150 = pneg %p56
      %p151 = pneg %p53
      %p152 = pneg %p77
      %p153 = pneg %p74
      %p154 = pneg %p103
      %p155 = pneg %p100
      %p156 = scmp.lt.s32.totalorder %s14, 1
      %s157 = scalar_select %p156, %s14, 1
      %s158 = smul.addr %s157, 8
      %s159 = smul.addr %s158, 8
      %s160 = scalar_lea.vmem %s3, %s159
      %p161 = scmp.lt.s32.totalorder %s14, 1
      %s162 = scalar_select %p161, %s14, 1
      %s163 = smul.addr %s162, 8
      %s164 = smul.addr %s163, 8
      %s165 = scalar_lea.vmem %s0, %s164
      %p166 = scmp.lt.s32.totalorder %s14, 1
      %s167 = scalar_select %p166, %s14, 1
      %s168 = smul.addr %s167, 8
      %s169 = smul.addr %s168, 8
      %s170 = scalar_lea.vmem %s3, %s169
      %v171 = vld [vmem:[%s165] sm:$0xff]
      %v172 = vld [vmem:[%s165 + $0x8] sm:$0xff]
      %v173 = vld [vmem:[%s165 + $0x10] sm:$0xff]
      %v174 = vld [vmem:[%s165 + $0x18] sm:$0xff]
      %v175 = vld [vmem:[%s165 + $0x20] sm:$0xff]
      %v176 = vld [vmem:[%s165 + $0x28] sm:$0xff]
      %v177 = vld [vmem:[%s165 + $0x30] sm:$0xff]
      %v178 = vld [vmem:[%s165 + $0x38] sm:$0xff]
      %v179 = vadd.f32 %v171, %v172
      %180 = vadd.xlane.f32.xlu0 %v179
      %v181 = vpop.xlane.xlu0 %180
      %v182 = vadd.f32 %v173, %v174
      %183 = vadd.xlane.f32.xlu0 %v182
      %v184 = vpop.xlane.xlu0 %183
      %v185 = vadd.f32 %v175, %v176
      %186 = vadd.xlane.f32.xlu0 %v185
      %v187 = vpop.xlane.xlu0 %186
      %v188 = vadd.f32 %v177, %v178
      %189 = vadd.xlane.f32.xlu0 %v188
      %v190 = vpop.xlane.xlu0 %189
      %v191 = vmul.f32 %v181, 0.00390625
      %v192 = vmul.f32 %v184, 0.00390625
      %v193 = vmul.f32 %v187, 0.00390625
      %v194 = vmul.f32 %v190, 0.00390625
      %v195 = vld [vmem:[%s1] sm:$0x3]
      %vm196 = vcmask 261120
      %v198 = vsel %vm196, %v195, 0
      %200 = vmatprep.subr.mxu0 0.0
      %201 = vmatpush1.msra.mxu0 %v191
      %202 = vmatprep.subr.mxu0 0.0
      %203 = vmatpush1.msra.mxu0 %v192
      %204 = vmatprep.subr.mxu0 0.0
      %205 = vmatpush1.msra.mxu0 %v193
      %206 = vmatprep.subr.mxu0 0.0
      %207 = vmatpush1.msra.mxu0 %v194
      %208 = vmatprep.subr.mxu0 0.0
      %209 = vmatpush1.msra.mxu0 0.0
      %210 = vmatprep.subr.mxu0 0.0
      %211 = vmatpush1.msra.mxu0 0.0
      %212 = vmatprep.subr.mxu0 0.0
      %213 = vmatpush1.msra.mxu0 0.0
      %214 = vmatprep.subr.mxu0 0.0
      %215 = vmatpush1.msra.mxu0 0.0
      %216 = vmatprep.subr.mxu0 0.0
      %217 = vmatpush1.msra.mxu0 0.0
      %218 = vmatprep.subr.mxu0 0.0
      %219 = vmatpush1.msra.mxu0 0.0
      %220 = vmatprep.subr.mxu0 0.0
      %221 = vmatpush1.msra.mxu0 0.0
      %222 = vmatprep.subr.mxu0 0.0
      %223 = vmatpush1.msra.mxu0 0.0
      %224 = vmatprep.subr.mxu0 0.0
      %225 = vmatpush1.msra.mxu0 0.0
      %226 = vmatprep.subr.mxu0 0.0
      %227 = vmatpush1.msra.mxu0 0.0
      %228 = vmatprep.subr.mxu0 0.0
      %229 = vmatpush1.msra.mxu0 0.0
      %230 = vmatprep.subr.mxu0 0.0
      %231 = vmatpush1.msra.mxu0 0.0
      %232 = vmatprep.subr.mxu0 0.0
      %233 = vmatpush1.msra.mxu0 0.0
      %234 = vmatprep.subr.mxu0 0.0
      %235 = vmatpush1.msra.mxu0 0.0
      %236 = vmatprep.subr.mxu0 0.0
      %237 = vmatpush1.msra.mxu0 0.0
      %238 = vmatprep.subr.mxu0 0.0
      %239 = vmatpush1.msra.mxu0 0.0
      %240 = vmatprep.subr.mxu0 0.0
      %241 = vmatpush1.msra.mxu0 0.0
      %242 = vmatprep.subr.mxu0 0.0
      %243 = vmatpush1.msra.mxu0 0.0
      %244 = vmatprep.subr.mxu0 0.0
      %245 = vmatpush1.msra.mxu0 0.0
      %246 = vmatprep.subr.mxu0 0.0
      %247 = vmatpush1.msra.mxu0 0.0
      %248 = vmatprep.subr.mxu0 0.0
      %249 = vmatpush1.msra.mxu0 0.0
      %250 = vmatprep.subr.mxu0 0.0
      %251 = vmatpush1.msra.mxu0 0.0
      %252 = vmatprep.subr.mxu0 0.0
      %253 = vmatpush1.msra.mxu0 0.0
      %254 = vmatprep.subr.mxu0 0.0
      %255 = vmatpush1.msra.mxu0 0.0
      %256 = vmatprep.subr.mxu0 0.0
      %257 = vmatpush1.msra.mxu0 0.0
      %258 = vmatprep.subr.mxu0 0.0
      %259 = vmatpush1.msra.mxu0 0.0
      %260 = vmatprep.subr.mxu0 0.0
      %261 = vmatpush1.msra.mxu0 0.0
      %262 = vmatprep.subr.mxu0 0.0
      %263 = vmatpush1.msra.mxu0 0.0
      %264 = vmatprep.mubr.f32.mxu0 0.0
      %265 = vmatmul.mubr.f32.gmra.mrb[0].mxu0 %v198
      %v266 = vpop.f32.mrb[0].mxu0
      %v267 = vadd.f32 0.0, %v266
      %v268 = vpop.f32.mrb[0].mxu0
      %269 = vdwg.mxu0
      %v270 = vmax.f32 %v267, 0.0
      %v271 = vld [vmem:[%s2] sm:$0xff]
      %v272 = vld [vmem:[%s2 + $0x8] sm:$0xff]
      %v273 = vld [vmem:[%s2 + $0x10] sm:$0xff]
      %v274 = vld [vmem:[%s2 + $0x18] sm:$0xff]
      %vm275 = vcmask 15360
      %v277 = vsel %vm275, %v271, 0
      %v280 = vsel %vm275, %v272, 0
      %v283 = vsel %vm275, %v273, 0
      %v286 = vsel %vm275, %v274, 0
      %vm288 = vcmask 1041408
      %v290 = vsel %vm288, %v270, 0
      %292 = vmatprep.subr.mxu0 0.0
      %293 = vmatpush1.msra.mxu0 %v290
      %294 = vmatprep.subr.mxu0 0.0
      %295 = vmatpush1.msra.mxu0 0.0
      %296 = vmatprep.subr.mxu0 0.0
      %297 = vmatpush1.msra.mxu0 0.0
      %298 = vmatprep.subr.mxu0 0.0
      %299 = vmatpush1.msra.mxu0 0.0
      %300 = vmatprep.subr.mxu0 0.0
      %301 = vmatpush1.msra.mxu0 0.0
      %302 = vmatprep.subr.mxu0 0.0
      %303 = vmatpush1.msra.mxu0 0.0
      %304 = vmatprep.subr.mxu0 0.0
      %305 = vmatpush1.msra.mxu0 0.0
      %306 = vmatprep.subr.mxu0 0.0
      %307 = vmatpush1.msra.mxu0 0.0
      %308 = vmatprep.subr.mxu0 0.0
      %309 = vmatpush1.msra.mxu0 0.0
      %310 = vmatprep.subr.mxu0 0.0
      %311 = vmatpush1.msra.mxu0 0.0
      %312 = vmatprep.subr.mxu0 0.0
      %313 = vmatpush1.msra.mxu0 0.0
      %314 = vmatprep.subr.mxu0 0.0
      %315 = vmatpush1.msra.mxu0 0.0
      %316 = vmatprep.subr.mxu0 0.0
      %317 = vmatpush1.msra.mxu0 0.0
      %318 = vmatprep.subr.mxu0 0.0
      %319 = vmatpush1.msra.mxu0 0.0
      %320 = vmatprep.subr.mxu0 0.0
      %321 = vmatpush1.msra.mxu0 0.0
      %322 = vmatprep.subr.mxu0 0.0
      %323 = vmatpush1.msra.mxu0 0.0
      %324 = vmatprep.subr.mxu0 0.0
      %325 = vmatpush1.msra.mxu0 0.0
      %326 = vmatprep.subr.mxu0 0.0
      %327 = vmatpush1.msra.mxu0 0.0
      %328 = vmatprep.subr.mxu0 0.0
      %329 = vmatpush1.msra.mxu0 0.0
      %330 = vmatprep.subr.mxu0 0.0
      %331 = vmatpush1.msra.mxu0 0.0
      %332 = vmatprep.subr.mxu0 0.0
      %333 = vmatpush1.msra.mxu0 0.0
      %334 = vmatprep.subr.mxu0 0.0
      %335 = vmatpush1.msra.mxu0 0.0
      %336 = vmatprep.subr.mxu0 0.0
      %337 = vmatpush1.msra.mxu0 0.0
      %338 = vmatprep.subr.mxu0 0.0
      %339 = vmatpush1.msra.mxu0 0.0
      %340 = vmatprep.subr.mxu0 0.0
      %341 = vmatpush1.msra.mxu0 0.0
      %342 = vmatprep.subr.mxu0 0.0
      %343 = vmatpush1.msra.mxu0 0.0
      %344 = vmatprep.subr.mxu0 0.0
      %345 = vmatpush1.msra.mxu0 0.0
      %346 = vmatprep.subr.mxu0 0.0
      %347 = vmatpush1.msra.mxu0 0.0
      %348 = vmatprep.subr.mxu0 0.0
      %349 = vmatpush1.msra.mxu0 0.0
      %350 = vmatprep.subr.mxu0 0.0
      %351 = vmatpush1.msra.mxu0 0.0
      %352 = vmatprep.subr.mxu0 0.0
      %353 = vmatpush1.msra.mxu0 0.0
      %354 = vmatprep.subr.mxu0 0.0
      %355 = vmatpush1.msra.mxu0 0.0
      %356 = vmatprep.mubr.f32.mxu0 0.0
      %357 = vmatmul.mubr.f32.gmra.mrb[0].mxu0 %v277
      %v358 = vpop.f32.mrb[0].mxu0
      %v359 = vadd.f32 0.0, %v358
      %v360 = vpop.f32.mrb[0].mxu0
      %361 = vmatprep.mubr.f32.mxu0 0.0
      %362 = vmatmul.mubr.f32.gmra.mrb[0].mxu0 %v280
      %v363 = vpop.f32.mrb[0].mxu0
      %v364 = vadd.f32 0.0, %v363
      %v365 = vpop.f32.mrb[0].mxu0
      %366 = vmatprep.mubr.f32.mxu0 0.0
      %367 = vmatmul.mubr.f32.gmra.mrb[0].mxu0 %v283
      %v368 = vpop.f32.mrb[0].mxu0
      %v369 = vadd.f32 0.0, %v368
      %v370 = vpop.f32.mrb[0].mxu0
      %371 = vmatprep.mubr.f32.mxu0 0.0
      %372 = vmatmul.mubr.f32.gmra.mrb[0].mxu0 %v286
      %v373 = vpop.f32.mrb[0].mxu0
      %v374 = vadd.f32 0.0, %v373
      %v375 = vpop.f32.mrb[0].mxu0
      %376 = vdwg.mxu0
      %v377 = vxor.u32 %v359, 2147483648
      %v378 = vxor.u32 %v364, 2147483648
      %v379 = vxor.u32 %v369, 2147483648
      %v380 = vxor.u32 %v374, 2147483648
      %v381 = vmul.f32 %v377, 1.442695
      %v382 = vpow.pop %v381
      %v383 = vmul.f32 %v378, 1.442695
      %v384 = vpow.pop %v383
      %v385 = vmul.f32 %v379, 1.442695
      %v386 = vpow.pop %v385
      %v387 = vmul.f32 %v380, 1.442695
      %v388 = vpow.pop %v387
      %v389 = vadd.f32 %v382, 1.0
      %v390 = vadd.f32 %v384, 1.0
      %v391 = vadd.f32 %v386, 1.0
      %v392 = vadd.f32 %v388, 1.0
      %v393 = vrcp.pop %v389
      %v394 = vmul.f32 1.0, %v393
      %v395 = vrcp.pop %v390
      %v396 = vmul.f32 1.0, %v395
      %v397 = vrcp.pop %v391
      %v398 = vmul.f32 1.0, %v397
      %v399 = vrcp.pop %v392
      %v400 = vmul.f32 1.0, %v399
      %402 = vset.pattern.permute.xlu0 0
      %403 = vperm.xlu0 %402, %v394
      %v404 = vpop.permute.xlu0 %403
      %407 = vset.pattern.permute.xlu0 0
      %408 = vperm.xlu0 %407, %v396
      %v409 = vpop.permute.xlu0 %408
      %412 = vset.pattern.permute.xlu0 0
      %413 = vperm.xlu0 %412, %v398
      %v414 = vpop.permute.xlu0 %413
      %417 = vset.pattern.permute.xlu0 0
      %418 = vperm.xlu0 %417, %v400
      %v419 = vpop.permute.xlu0 %418
      %v421 = vmul.f32 %v171, %v404
      %v422 = vmul.f32 %v172, %v404
      %v423 = vmul.f32 %v173, %v409
      %v424 = vmul.f32 %v174, %v409
      %v425 = vmul.f32 %v175, %v414
      %v426 = vmul.f32 %v176, %v414
      %v427 = vmul.f32 %v177, %v419
      %v428 = vmul.f32 %v178, %v419
      %429 = vst [vmem:[%s170] sm:$0xff] %v421
      %430 = vst [vmem:[%s170 + $0x8] sm:$0xff] %v422
      %431 = vst [vmem:[%s170 + $0x10] sm:$0xff] %v423
      %432 = vst [vmem:[%s170 + $0x18] sm:$0xff] %v424
      %433 = vst [vmem:[%s170 + $0x20] sm:$0xff] %v425
      %434 = vst [vmem:[%s170 + $0x28] sm:$0xff] %v426
      %435 = vst [vmem:[%s170 + $0x30] sm:$0xff] %v427
      %436 = vst [vmem:[%s170 + $0x38] sm:$0xff] %v428
      %p437 = scmp.lt.s32.totalorder %s14, 1
      %s438 = scalar_select %p437, %s14, 1
      %s439 = smul.addr %s438, 8
      %s440 = smul.addr %s439, 8
      %s441 = scalar_lea.vmem %s3, %s440
      // Predicated region
      $region33: #{attention_layer.1} parent=31 // pred_check
        %p442 = pneg %p100
      $region34: #{attention_layer.1} parent=31 // pred_check_branch
        %444 = sbr.rel (%p442) target = $region36
      $region35: #{attention_layer.1} parent=31 // pred_region
        _
      $region36: #{attention_layer.1} parent=31 // pred_fallthru
        _
    $region32: #{attention_layer.1} parent=5 // pred_fallthru
      _
    %p445 = scmp.le.s32.totalorder 2, %s9
    // Predicated region
    $region37: #{attention_layer.1} parent=5 // pred_check
      %p446 = pneg %p445
    $region38: #{attention_layer.1} parent=5 // pred_check_branch
      %448 = sbr.rel (%p446) target = $region40
    $region39: #{attention_layer.1} parent=5 // pred_region
      %s449 = ssub.s32 %s9, 2
      // Predicated region
      $region41: #{attention_layer.1} parent=39 // pred_check
        %p450 = pneg %p106
      $region42: #{attention_layer.1} parent=39 // pred_check_branch
        %452 = sbr.rel (%p450) target = $region44
      $region43: #{attention_layer.1} parent=39 // pred_region
        %p453 = scmp.lt.s32.totalorder %s15, 1
        %s454 = scalar_select %p453, %s15, 1
        %s455 = smul.addr %s454, 8
        %s456 = smul.addr %s455, 8
        %s457 = scalar_lea.vmem %s3, %s456
      $region44: #{attention_layer.1} parent=39 // pred_fallthru
        _
    $region40: #{attention_layer.1} parent=5 // pred_fallthru
      _
  $region6: #{attention_layer.1} parent=0 // loop_footer
    %s13 = sadd.s32 1, %s9
  $region7: #{attention_layer.1} parent=0 // loop_footer_branch
    %8 = sbr.rel target = $region3
  $region8: #{attention_layer.1} parent=0 // loop_exit
    _

</llo_original>
